<compile_context>
chip_gen: v5e
topology: v5e:2x2
jax: 0.10.0
libtpu: 0.0.40
codegen_flags: <defaults>
</compile_context>

<pallas_src>
import numpy as np
import jax
import jax.numpy as jnp
from jax.experimental import pallas as pl
from jax.experimental.pallas import tpu as pltpu

LANE = 128
_VMEM_BUDGET_BYTES = 16 * 1024 * 1024   # target for double-buffered (in + out) blocks
_VMEM_LIMIT_BYTES = 32 * 1024 * 1024    # raise v5e's 16 MiB scoped-VMEM default


def _sublane(dtype) -> int:
    # dtype-aware second-minor tiling: 8 rows (32-bit), 16 (16-bit), 32 (8-bit).
    return max(8, 32 // jnp.dtype(dtype).itemsize)


def _round_up(x: int, m: int) -> int:
    return ((x + m - 1) // m) * m


def _round_down(x: int, m: int) -> int:
    return (x // m) * m


def _repeat_channels_kernel(x_ref, o_ref):
    # x_ref: (tile_r, 128) input tile. o_ref: (n_repeat, tile_r, 128).
    # Load the tile once; store the same vregs n_repeat times (trace-time loop,
    # n_repeat is static). Input is read from HBM exactly once per tile.
    v = x_ref[...]
    for r in range(o_ref.shape[0]):
        o_ref[r] = v


def repeat_channels(x: jax.Array, n_repeat: int) -> jax.Array:
    """x: (C, H, W) -> (n_repeat * C, H, W), same dtype. Matches x.repeat(n,1,1)."""
    c, h, w = x.shape
    dtype = x.dtype
    itemsize = jnp.dtype(dtype).itemsize
    sub = _sublane(dtype)

    total = c * h * w
    rows = pl.cdiv(total, LANE)
    total_pad = rows * LANE

    # Lane-dense (rows, 128) slab; channels are packed into the row axis.
    x_flat = x.reshape(total)
    if total_pad != total:
        x_flat = jnp.pad(x_flat, (0, total_pad - total))
    x2d = x_flat.reshape(rows, LANE)

    # Tile rows from VMEM budget: 2 buffers x (1 input + n_repeat output) blocks.
    max_rows = _VMEM_BUDGET_BYTES // (2 * (1 + n_repeat) * LANE * itemsize)
    max_rows = max(_round_down(max_rows, sub), sub)

    if rows <= max_rows:
        tile_r = rows  # single full-extent tile (always a legal block shape)
    else:
        tile_r = max_rows  # multiple of sublane; ragged edge tile is masked by Pallas

    # Ensure >= 2 grid steps on the parallel axis when it's cheap to do so
    # (lets v7x's 2 TensorCores each drive half the HBM traffic).
    if rows > 2 * sub and pl.cdiv(rows, tile_r) < 2:
        tile_r = _round_up(pl.cdiv(rows, 2), sub)

    grid = (pl.cdiv(rows, tile_r),)

    out = pl.pallas_call(
        _repeat_channels_kernel,
        out_shape=jax.ShapeDtypeStruct((n_repeat, rows, LANE), dtype),
        grid=grid,
        in_specs=[pl.BlockSpec((tile_r, LANE), lambda i: (i, 0))],
        out_specs=pl.BlockSpec((n_repeat, tile_r, LANE), lambda i: (0, i, 0)),
        compiler_params=pltpu.CompilerParams(
            dimension_semantics=("parallel",),
            vmem_limit_bytes=_VMEM_LIMIT_BYTES,
        ),
    )(x2d)

    out = out.reshape(n_repeat, total_pad)
    if total_pad != total:
        out = out[:, :total]  # only pays an extra pass when C*H*W % 128 != 0
    return out.reshape(n_repeat * c, h, w)


def repeat_channels_reference(x: np.ndarray, n_repeat: int) -> np.ndarray:
    """Numpy reference of torch's x.repeat(n_repeat, 1, 1)."""
    return np.tile(x, (n_repeat, 1, 1))


if __name__ == "__main__":
    key = jax.random.PRNGKey(0)
    k1, k2, k3, k4 = jax.random.split(key, 4)

    # Canonical use: grayscale (1, H, W) -> (3, H, W). 256 elems -> no padding.
    x1 = jax.random.uniform(k1, (1, 16, 16), dtype=jnp.float32)
    out1 = jax.block_until_ready(repeat_channels(x1, n_repeat=3))
    assert out1.shape == (3, 16, 16), out1.shape
    assert out1.dtype == x1.dtype, out1.dtype
    np.testing.assert_array_equal(np.asarray(out1), repeat_channels_reference(np.asarray(x1), 3))

    # Multi-channel case to exercise the r*C + c output mapping.
    x2 = jax.random.uniform(k2, (2, 16, 16), dtype=jnp.float32)
    out2 = jax.block_until_ready(repeat_channels(x2, n_repeat=2))
    assert out2.shape == (4, 16, 16), out2.shape
    np.testing.assert_array_equal(np.asarray(out2), repeat_channels_reference(np.asarray(x2), 2))

    # Multi-tile grid (row axis split into >= 2 parallel steps).
    x3 = jax.random.uniform(k3, (4, 64, 128), dtype=jnp.float32)
    out3 = jax.block_until_ready(repeat_channels(x3, n_repeat=3))
    assert out3.shape == (12, 64, 128), out3.shape
    np.testing.assert_array_equal(np.asarray(out3), repeat_channels_reference(np.asarray(x3), 3))

    # Ragged spatial size (C*H*W not a multiple of 128): padding + slice path.
    x4 = jax.random.uniform(k4, (2, 10, 13), dtype=jnp.float32)
    out4 = jax.block_until_ready(repeat_channels(x4, n_repeat=3))
    assert out4.shape == (6, 10, 13), out4.shape
    np.testing.assert_array_equal(np.asarray(out4), repeat_channels_reference(np.asarray(x4), 3))

    print("KERNEL_OK")
</pallas_src>

<mosaic_0001>
module attributes {stable_mosaic.version = 11 : i64} {
  func.func @_repeat_channels_kernel(%arg0: i32, %arg1: memref<2x128xf32, #tpu.memory_space<vmem>>, %arg2: memref<3x2x128xf32, #tpu.memory_space<vmem>>) attributes {dimension_semantics = [#tpu.dimension_semantics<parallel>], iteration_bounds = array<i64: 1>, scalar_prefetch = 0 : i64, scratch_operands = 0 : i64, tpu.core_type = #tpu.core_type<tc>, window_params = [{transform_indices = @transform_0, window_bounds = array<i64: 2, 128>}, {transform_indices = @transform_1, window_bounds = array<i64: 3, 2, 128>}]} {
    %c0 = arith.constant 0 : index
    %c0_0 = arith.constant 0 : index
    %0 = vector.load %arg1[%c0, %c0_0] : memref<2x128xf32, #tpu.memory_space<vmem>>, vector<2x128xf32>
    %c0_1 = arith.constant 0 : index
    %c0_2 = arith.constant 0 : index
    %c0_3 = arith.constant 0 : index
    %1 = vector.load %arg2[%c0_1, %c0_2, %c0_3] : memref<3x2x128xf32, #tpu.memory_space<vmem>>, vector<1x2x128xf32>
    %2 = vector.shape_cast %1 : vector<1x2x128xf32> to vector<2x128xf32>
    %3 = vector.shape_cast %0 : vector<2x128xf32> to vector<1x2x128xf32>
    tpu.vector_store %arg2[%c0_1, %c0_2, %c0_3], %3 {strides = array<i32>} : memref<3x2x128xf32, #tpu.memory_space<vmem>>, vector<1x2x128xf32>,
    %c1 = arith.constant 1 : index
    %c0_4 = arith.constant 0 : index
    %c0_5 = arith.constant 0 : index
    %4 = vector.load %arg2[%c1, %c0_4, %c0_5] : memref<3x2x128xf32, #tpu.memory_space<vmem>>, vector<1x2x128xf32>
    %5 = vector.shape_cast %4 : vector<1x2x128xf32> to vector<2x128xf32>
    %6 = vector.shape_cast %0 : vector<2x128xf32> to vector<1x2x128xf32>
    tpu.vector_store %arg2[%c1, %c0_4, %c0_5], %6 {strides = array<i32>} : memref<3x2x128xf32, #tpu.memory_space<vmem>>, vector<1x2x128xf32>,
    %c2 = arith.constant 2 : index
    %c0_6 = arith.constant 0 : index
    %c0_7 = arith.constant 0 : index
    %7 = vector.load %arg2[%c2, %c0_6, %c0_7] : memref<3x2x128xf32, #tpu.memory_space<vmem>>, vector<1x2x128xf32>
    %8 = vector.shape_cast %7 : vector<1x2x128xf32> to vector<2x128xf32>
    %9 = vector.shape_cast %0 : vector<2x128xf32> to vector<1x2x128xf32>
    tpu.vector_store %arg2[%c2, %c0_6, %c0_7], %9 {strides = array<i32>} : memref<3x2x128xf32, #tpu.memory_space<vmem>>, vector<1x2x128xf32>,
    return
  }
  func.func @transform_0(%arg0: i32) -> (i32, i32) {
    %c0_i32 = arith.constant 0 : i32
    %c0_i32_0 = arith.constant 0 : i32
    return %arg0, %c0_i32 : i32, i32
  }
  func.func @transform_1(%arg0: i32) -> (i32, i32, i32) {
    %c0_i32 = arith.constant 0 : i32
    %c0_i32_0 = arith.constant 0 : i32
    %c0_i32_1 = arith.constant 0 : i32
    return %c0_i32, %arg0, %c0_i32_0 : i32, i32, i32
  }
}

</mosaic_0001>

<llo_original>
// kernel: tpu_custom_call.1
$region0: #{tpu_custom_call.1}
  #allocation0 [shape = 'u32[]', space=smem, size = 0x4, offset = 0x4, fixed_abs, tag = 'smem constant byte address 0x4 - core index']
  #allocation1 [shape = 'u32[72,128]{1,0:T(1,128)}', space=vmem, size = 0x9000, scoped, tag = 'internal scratch']
  %s0 = inlined_call_operand.hbm [shape: f32[2,128], index: 0, kind: input, shape index: {}]
  %s1 = inlined_call_operand.hbm [shape: f32[3,2,128], index: 1, kind: output, shape index: {}]
  %s2 = sld [smem:[#allocation0]]
  $region18: #{tpu_custom_call.1} parent=0
    _
  %s4 = ssub.s32 1, %s2
  %s5 = scalar_select 0, %s4, %s2
  $region1: #{tpu_custom_call.1} parent=0
    #allocation2 [shape = 'u8[1024]{0}', space=vmem, size = 0x400, scoped, tag = 'input window, operand 0, single buffered']
    #allocation3 [shape = 's32[1]{0}', space=sflag, size = 0x4, scoped, tag = 'scoped memory for tpu_custom_call.1']
    #allocation4 [shape = 's32[1]{0}', space=sflag, size = 0x4, scoped, tag = 'scoped memory for tpu_custom_call.1']
    #allocation5 [shape = 'u8[3072]{0}', space=vmem, size = 0xc00, scoped, tag = 'output window, operand 0, single buffered']
    %6 = vsyncpa [#allocation3], 0
    %7 = vsyncpa [#allocation4], 0
    // Predicated region
    $region2: #{tpu_custom_call.1} parent=1 // pred_check
      _
    $region3: #{tpu_custom_call.1} parent=1 // pred_check_branch
      %9 = sbr.rel (0) target = $region5
    $region4: #{tpu_custom_call.1} parent=1 // pred_region
      %11 = vsyncadd [#allocation3], 0
      %s13 = sshll.u32 %s0, 4
      %s14 = int_to_ptr.hbm [resolvable:$true] %s13
      %s15 = sshll.u32 [#allocation2], 4
      %s16 = int_to_ptr.vmem [resolvable:$true] %s15
      %18 = dma.hbm_to_vmem [thread:$0]  %s14, 32, %s16, [#allocation3]
    $region5: #{tpu_custom_call.1} parent=1 // pred_fallthru
      _
    // Predicated region
    $region6: #{tpu_custom_call.1} parent=1 // pred_check
      _
    $region7: #{tpu_custom_call.1} parent=1 // pred_check_branch
      %20 = sbr.rel (0) target = $region9
    $region8: #{tpu_custom_call.1} parent=1 // pred_region
      %22 = dma.done [#allocation3], 32
    $region9: #{tpu_custom_call.1} parent=1 // pred_fallthru
      _
    %v23 = vld [vmem:[#allocation2] sm:$0x3]
    %24 = vst [vmem:[#allocation5] sm:$0x3] %v23
    %s25 = scalar_lea.vmem [#allocation5], 2
    %26 = vst [vmem:[%s25] sm:$0x3] %v23
    %s27 = scalar_lea.vmem [#allocation5], 4
    %28 = vst [vmem:[%s27] sm:$0x3] %v23
    // Predicated region
    $region10: #{tpu_custom_call.1} parent=1 // pred_check
      _
    $region11: #{tpu_custom_call.1} parent=1 // pred_check_branch
      %30 = sbr.rel (0) target = $region13
    $region12: #{tpu_custom_call.1} parent=1 // pred_region
      %32 = vsyncadd [#allocation4], 0
      %s33 = sshll.u32 [#allocation5], 4
      %s34 = int_to_ptr.vmem [resolvable:$true] %s33
      %s35 = sshll.u32 %s1, 4
      %s36 = int_to_ptr.hbm [resolvable:$true] %s35
      %41 = dma.vmem_to_hbm [thread:$0]  %s34, 96, %s36, [#allocation4], 32, 32, 2
    $region13: #{tpu_custom_call.1} parent=1 // pred_fallthru
      _
    // Predicated region
    $region14: #{tpu_custom_call.1} parent=1 // pred_check
      _
    $region15: #{tpu_custom_call.1} parent=1 // pred_check_branch
      %43 = sbr.rel (0) target = $region17
    $region16: #{tpu_custom_call.1} parent=1 // pred_region
      %45 = dma.done [#allocation4], 96
    $region17: #{tpu_custom_call.1} parent=1 // pred_fallthru
      _
    %46 = vsyncpa [#allocation3], 1
    %47 = vsyncpa [#allocation4], 1

</llo_original>
